<compile_context>
chip_gen: v7x
topology: tpu7x:2x2x1
jax: 0.10.0
libtpu: 0.0.40
codegen_flags: <defaults>
</compile_context>

<pallas_src>
import functools

import jax
import jax.numpy as jnp
from jax.experimental import pallas as pl
from jax.experimental.pallas import tpu as pltpu

LANE = 128        # lane width: only the HBM-written output dim is padded to this
SUBLANE = 8       # f32 sublane height: batch tiles are multiples of this
NEG_MASK = -1e30  # baked into b3's padded entries -> exp underflows to exactly 0


def _round_up(n, m):
    return ((n + m - 1) // m) * m


def _mlp_softmax_kernel(x_ref, w1_ref, b1_ref, w2_ref, b2_ref, w3_ref, b3_ref,
                        *out_refs, write_logits, matmul_dtype):
    """fc1+ReLU -> fc2+ReLU -> fc3 -> fused softmax, one batch tile per grid step."""

    def dense(a, w_ref, b_ref):
        # Cast only the dot operands (bf16 on v6e/v7x halves MXU passes); bias add,
        # ReLU and the softmax stay f32 so v5e's VPU/EUP never emulate bf16.
        return jnp.dot(a.astype(matmul_dtype), w_ref[...].astype(matmul_dtype),
                       preferred_element_type=jnp.float32) + b_ref[...]

    h1 = jnp.maximum(dense(x_ref[...], w1_ref, b1_ref), 0.0)
    h2 = jnp.maximum(dense(h1, w2_ref, b2_ref), 0.0)
    logits = dense(h2, w3_ref, b3_ref)   # padded columns carry NEG_MASK via b3

    if write_logits:
        logits_ref, probs_ref = out_refs
        logits_ref[...] = logits         # lane-dense (tile_b, 128) store
    else:
        (probs_ref,) = out_refs

    # Fused softmax (apply_softmax).  No runtime column mask needed: padded logit
    # columns are NEG_MASK, so exp(NEG_MASK - row_max) == 0 and the denom is exact.
    # exp -> EUP slot, max/sum -> XLU slot, approx reciprocal -> EUP vrcp slot.
    row_max = jnp.max(logits, axis=-1, keepdims=True)
    e = jnp.exp(logits - row_max)
    denom = jnp.sum(e, axis=-1, keepdims=True)
    probs_ref[...] = e * pl.reciprocal(denom, approx=True)


def neural_net_forward(x, params, output_size, *, return_logits=False,
                       matmul_dtype=jnp.float32, max_batch_tile=1024):
    """x: (B, input_size) f32.  Returns probs (B, output_size), or (logits, probs)
    if return_logits=True."""
    w1, b1, w2, b2, w3, b3 = (params["w1"], params["b1"], params["w2"],
                              params["b2"], params["w3"], params["b3"])
    B, in_size = x.shape
    hidden = w1.shape[1]
    out_pad = w3.shape[1]

    # Pad only the batch (sublane/tile) axis; x keeps its native feature width.
    tile_b = min(max_batch_tile, _round_up(B, SUBLANE))
    b_pad = _round_up(B, tile_b)
    x_p = x if b_pad == B else jnp.zeros((b_pad, in_size), x.dtype).at[:B].set(x)

    grid = (b_pad // tile_b,)

    def const_spec(shape):
        return pl.BlockSpec(shape, lambda i: (0,) * len(shape))

    out_shapes = [jax.ShapeDtypeStruct((b_pad, out_pad), jnp.float32)]   # probs
    out_specs = [pl.BlockSpec((tile_b, out_pad), lambda i: (i, 0))]
    if return_logits:
        out_shapes = [jax.ShapeDtypeStruct((b_pad, out_pad), jnp.float32)] + out_shapes
        out_specs = [pl.BlockSpec((tile_b, out_pad), lambda i: (i, 0))] + out_specs
    n_out = len(out_shapes)

    # Advisory cost estimate from the unpadded problem size.
    flops = 2 * B * (in_size * hidden + hidden * hidden + hidden * output_size)
    transcendentals = B * (output_size + 1)            # exp per valid column + rcp
    bytes_accessed = 4 * (B * in_size
                          + in_size * hidden + hidden
                          + hidden * hidden + hidden
                          + hidden * output_size + output_size
                          + n_out * B * output_size)

    outs = pl.pallas_call(
        functools.partial(_mlp_softmax_kernel, write_logits=return_logits,
                          matmul_dtype=matmul_dtype),
        out_shape=tuple(out_shapes),
        grid=grid,
        in_specs=[
            pl.BlockSpec((tile_b, in_size), lambda i: (i, 0)),   # streamed batch tile
            const_spec(w1.shape), const_spec(b1.shape),          # constant index_map:
            const_spec(w2.shape), const_spec(b2.shape),          #   weight DMA elided
            const_spec(w3.shape), const_spec(b3.shape),          #   across grid steps
        ],
        out_specs=tuple(out_specs),
        compiler_params=pltpu.CompilerParams(
            dimension_semantics=("parallel",)),   # batch tiles across TCs on v7x
        cost_estimate=pl.CostEstimate(flops=flops, transcendentals=transcendentals,
                                      bytes_accessed=bytes_accessed),
    )(x_p, w1, b1, w2, b2, w3, b3)

    if return_logits:
        logits_p, probs_p = outs
        return logits_p[:B, :output_size], probs_p[:B, :output_size]
    probs_p = outs[0] if isinstance(outs, (tuple, list)) else outs
    return probs_p[:B, :output_size]


def init_params(key, input_size, hidden_size, output_size):
    """nn.Linear-style U(-1/sqrt(fan_in), 1/sqrt(fan_in)) init; weights stored
    transposed to (in, out) so y = x @ W + b matches PyTorch's x @ W.T + b.

    fc1/fc2 are kept at their native sizes (intermediates are VMEM-only); only
    fc3's output dim is zero-padded to 128 lanes for a dense final writeback, and
    its padded bias entries are NEG_MASK so the fused softmax needs no masking.
    """
    out_pad = _round_up(max(output_size, 1), LANE)
    ks = jax.random.split(key, 6)

    def lin(kw, kb, fan_in, fan_out):
        bound = 1.0 / jnp.sqrt(jnp.float32(fan_in))
        w = jax.random.uniform(kw, (fan_in, fan_out), jnp.float32, -bound, bound)
        b = jax.random.uniform(kb, (1, fan_out), jnp.float32, -bound, bound)
        return w, b

    w1, b1 = lin(ks[0], ks[1], input_size, hidden_size)
    w2, b2 = lin(ks[2], ks[3], hidden_size, hidden_size)
    w3v, b3v = lin(ks[4], ks[5], hidden_size, output_size)
    w3 = jnp.zeros((hidden_size, out_pad), jnp.float32).at[:, :output_size].set(w3v)
    b3 = jnp.full((1, out_pad), NEG_MASK, jnp.float32).at[:, :output_size].set(b3v)
    return {"w1": w1, "b1": b1, "w2": w2, "b2": b2, "w3": w3, "b3": b3}


if __name__ == "__main__":
    # CartPole-v1: observation dim = 4, action dim = 2.
    input_size, hidden_size, output_size = 4, 32, 2
    batch = 2

    key = jax.random.PRNGKey(0)
    k_x, k_p = jax.random.split(key)
    x = jax.random.normal(k_x, (batch, input_size), jnp.float32)
    params = init_params(k_p, input_size, hidden_size, output_size)

    # Optimized default path: probs only (single lane-dense HBM writeback).
    probs = jax.block_until_ready(neural_net_forward(x, params, output_size))
    # Full forward() semantics (logits) remain available on request.
    logits, probs2 = neural_net_forward(x, params, output_size, return_logits=True)
    logits = jax.block_until_ready(logits)
    probs2 = jax.block_until_ready(probs2)

    # Pure-JAX reference of the same forward pass (valid sub-blocks only).
    def ref(x, p):
        w1, b1 = p["w1"], p["b1"]
        w2, b2 = p["w2"], p["b2"]
        w3 = p["w3"][:, :output_size]
        b3 = p["b3"][:, :output_size]
        h1 = jnp.maximum(x @ w1 + b1, 0.0)
        h2 = jnp.maximum(h1 @ w2 + b2, 0.0)
        lg = h2 @ w3 + b3
        return lg, jax.nn.softmax(lg, axis=1)

    expected_logits, expected_probs = ref(x, params)
    assert probs.shape == (batch, output_size)
    assert logits.shape == (batch, output_size)
    assert jnp.allclose(logits, expected_logits, atol=1e-5, rtol=1e-5)
    # pl.reciprocal(approx=True) carries ~1e-3 relative error -> relaxed tolerance.
    assert jnp.allclose(probs, expected_probs, atol=2e-3, rtol=2e-3)
    assert jnp.allclose(probs2, expected_probs, atol=2e-3, rtol=2e-3)

    # TODO(synk): choose_action (torch.multinomial sampling) and
    # get_log_prob_gradient (autograd backward) are host/JAX-level RL utilities,
    # not part of the forward hot path, so they are not implemented as kernels.
    print("KERNEL_OK")
</pallas_src>

<mosaic_0001>
module attributes {stable_mosaic.version = 11 : i64} {
  func.func @_mlp_softmax_kernel(%arg0: i32, %arg1: memref<8x4xf32, #tpu.memory_space<vmem>>, %arg2: memref<4x32xf32, #tpu.memory_space<vmem>>, %arg3: memref<1x32xf32, #tpu.memory_space<vmem>>, %arg4: memref<32x32xf32, #tpu.memory_space<vmem>>, %arg5: memref<1x32xf32, #tpu.memory_space<vmem>>, %arg6: memref<32x128xf32, #tpu.memory_space<vmem>>, %arg7: memref<1x128xf32, #tpu.memory_space<vmem>>, %arg8: memref<8x128xf32, #tpu.memory_space<vmem>>) attributes {dimension_semantics = [#tpu.dimension_semantics<parallel>], iteration_bounds = array<i64: 1>, scalar_prefetch = 0 : i64, scratch_operands = 0 : i64, tpu.core_type = #tpu.core_type<tc>, window_params = [{transform_indices = @transform_0, window_bounds = array<i64: 8, 4>}, {pipeline_mode = #tpu.pipeline_mode<synchronous>, transform_indices = @transform_1, window_bounds = array<i64: 4, 32>}, {pipeline_mode = #tpu.pipeline_mode<synchronous>, transform_indices = @transform_2, window_bounds = array<i64: 1, 32>}, {pipeline_mode = #tpu.pipeline_mode<synchronous>, transform_indices = @transform_3, window_bounds = array<i64: 32, 32>}, {pipeline_mode = #tpu.pipeline_mode<synchronous>, transform_indices = @transform_4, window_bounds = array<i64: 1, 32>}, {pipeline_mode = #tpu.pipeline_mode<synchronous>, transform_indices = @transform_5, window_bounds = array<i64: 32, 128>}, {pipeline_mode = #tpu.pipeline_mode<synchronous>, transform_indices = @transform_6, window_bounds = array<i64: 1, 128>}, {transform_indices = @transform_7, window_bounds = array<i64: 8, 128>}]} {
    %c0 = arith.constant 0 : index
    %c0_0 = arith.constant 0 : index
    %0 = vector.load %arg1[%c0, %c0_0] : memref<8x4xf32, #tpu.memory_space<vmem>>, vector<8x4xf32>
    %c0_1 = arith.constant 0 : index
    %c0_2 = arith.constant 0 : index
    %1 = vector.load %arg2[%c0_1, %c0_2] : memref<4x32xf32, #tpu.memory_space<vmem>>, vector<4x32xf32>
    %cst = arith.constant dense<0.000000e+00> : vector<8x32xf32>
    %2 = tpu.matmul %0, %1, %cst {dimension_numbers = #tpu.dot_dimension_numbers<[1], [0], [0], [1], [0, 0, 1, 1], [], []>} : vector<8x4xf32>, vector<4x32xf32>, vector<8x32xf32> -> vector<8x32xf32>
    %c0_3 = arith.constant 0 : index
    %c0_4 = arith.constant 0 : index
    %3 = vector.load %arg3[%c0_3, %c0_4] : memref<1x32xf32, #tpu.memory_space<vmem>>, vector<1x32xf32>
    %4 = vector.broadcast %3 : vector<1x32xf32> to vector<8x32xf32>
    %5 = arith.addf %2, %4 : vector<8x32xf32>
    %cst_5 = arith.constant 0.000000e+00 : f32
    %6 = vector.broadcast %cst_5 : f32 to vector<8x32xf32>
    %7 = arith.maximumf %5, %6 : vector<8x32xf32>
    %c0_6 = arith.constant 0 : index
    %c0_7 = arith.constant 0 : index
    %8 = vector.load %arg4[%c0_6, %c0_7] : memref<32x32xf32, #tpu.memory_space<vmem>>, vector<32x32xf32>
    %cst_8 = arith.constant dense<0.000000e+00> : vector<8x32xf32>
    %9 = tpu.matmul %7, %8, %cst_8 {dimension_numbers = #tpu.dot_dimension_numbers<[1], [0], [0], [1], [0, 0, 1, 1], [], []>} : vector<8x32xf32>, vector<32x32xf32>, vector<8x32xf32> -> vector<8x32xf32>
    %c0_9 = arith.constant 0 : index
    %c0_10 = arith.constant 0 : index
    %10 = vector.load %arg5[%c0_9, %c0_10] : memref<1x32xf32, #tpu.memory_space<vmem>>, vector<1x32xf32>
    %11 = vector.broadcast %10 : vector<1x32xf32> to vector<8x32xf32>
    %12 = arith.addf %9, %11 : vector<8x32xf32>
    %cst_11 = arith.constant 0.000000e+00 : f32
    %13 = vector.broadcast %cst_11 : f32 to vector<8x32xf32>
    %14 = arith.maximumf %12, %13 : vector<8x32xf32>
    %c0_12 = arith.constant 0 : index
    %c0_13 = arith.constant 0 : index
    %15 = vector.load %arg6[%c0_12, %c0_13] : memref<32x128xf32, #tpu.memory_space<vmem>>, vector<32x128xf32>
    %cst_14 = arith.constant dense<0.000000e+00> : vector<8x128xf32>
    %16 = tpu.matmul %14, %15, %cst_14 {dimension_numbers = #tpu.dot_dimension_numbers<[1], [0], [0], [1], [0, 0, 1, 1], [], []>} : vector<8x32xf32>, vector<32x128xf32>, vector<8x128xf32> -> vector<8x128xf32>
    %c0_15 = arith.constant 0 : index
    %c0_16 = arith.constant 0 : index
    %17 = vector.load %arg7[%c0_15, %c0_16] : memref<1x128xf32, #tpu.memory_space<vmem>>, vector<1x128xf32>
    %18 = vector.broadcast %17 : vector<1x128xf32> to vector<8x128xf32>
    %19 = arith.addf %16, %18 : vector<8x128xf32>
    %cst_17 = arith.constant dense<0xFF800000> : vector<8xf32>
    %20 = vector.multi_reduction <maximumf>, %19, %cst_17 [1] : vector<8x128xf32> to vector<8xf32>
    %21 = vector.shape_cast %20 : vector<8xf32> to vector<8x1xf32>
    %22 = vector.broadcast %21 : vector<8x1xf32> to vector<8x128xf32>
    %23 = arith.subf %19, %22 : vector<8x128xf32>
    %24 = math.exp %23 : vector<8x128xf32>
    %cst_18 = arith.constant dense<0.000000e+00> : vector<8xf32>
    %25 = vector.multi_reduction <add>, %24, %cst_18 [1] : vector<8x128xf32> to vector<8xf32>
    %26 = vector.shape_cast %25 : vector<8xf32> to vector<8x1xf32>
    %27 = tpu.reciprocal %26 {approx = true} : vector<8x1xf32> -> vector<8x1xf32>
    %28 = vector.broadcast %27 : vector<8x1xf32> to vector<8x128xf32>
    %29 = arith.mulf %24, %28 : vector<8x128xf32>
    %c0_19 = arith.constant 0 : index
    %c0_20 = arith.constant 0 : index
    %30 = vector.load %arg8[%c0_19, %c0_20] : memref<8x128xf32, #tpu.memory_space<vmem>>, vector<8x128xf32>
    tpu.vector_store %arg8[%c0_19, %c0_20], %29 {strides = array<i32>} : memref<8x128xf32, #tpu.memory_space<vmem>>, vector<8x128xf32>,
    return
  }
  func.func @transform_0(%arg0: i32) -> (i32, i32) {
    %c0_i32 = arith.constant 0 : i32
    %c0_i32_0 = arith.constant 0 : i32
    return %arg0, %c0_i32 : i32, i32
  }
  func.func @transform_1(%arg0: i32) -> (i32, i32) {
    %c0_i32 = arith.constant 0 : i32
    %c0_i32_0 = arith.constant 0 : i32
    %c0_i32_1 = arith.constant 0 : i32
    return %c0_i32, %c0_i32_0 : i32, i32
  }
  func.func @transform_2(%arg0: i32) -> (i32, i32) {
    %c0_i32 = arith.constant 0 : i32
    %c0_i32_0 = arith.constant 0 : i32
    %c0_i32_1 = arith.constant 0 : i32
    return %c0_i32, %c0_i32_0 : i32, i32
  }
  func.func @transform_3(%arg0: i32) -> (i32, i32) {
    %c0_i32 = arith.constant 0 : i32
    %c0_i32_0 = arith.constant 0 : i32
    %c0_i32_1 = arith.constant 0 : i32
    return %c0_i32, %c0_i32_0 : i32, i32
  }
  func.func @transform_4(%arg0: i32) -> (i32, i32) {
    %c0_i32 = arith.constant 0 : i32
    %c0_i32_0 = arith.constant 0 : i32
    %c0_i32_1 = arith.constant 0 : i32
    return %c0_i32, %c0_i32_0 : i32, i32
  }
  func.func @transform_5(%arg0: i32) -> (i32, i32) {
    %c0_i32 = arith.constant 0 : i32
    %c0_i32_0 = arith.constant 0 : i32
    %c0_i32_1 = arith.constant 0 : i32
    return %c0_i32, %c0_i32_0 : i32, i32
  }
  func.func @transform_6(%arg0: i32) -> (i32, i32) {
    %c0_i32 = arith.constant 0 : i32
    %c0_i32_0 = arith.constant 0 : i32
    %c0_i32_1 = arith.constant 0 : i32
    return %c0_i32, %c0_i32_0 : i32, i32
  }
  func.func @transform_7(%arg0: i32) -> (i32, i32) {
    %c0_i32 = arith.constant 0 : i32
    %c0_i32_0 = arith.constant 0 : i32
    return %arg0, %c0_i32 : i32, i32
  }
}

</mosaic_0001>

<llo_original>
// kernel: tpu_custom_call.1
$region0: #{tpu_custom_call.1}
  #allocation0 [shape = 'u32[]', space=smem, size = 0x4, offset = 0x4, fixed_abs, tag = 'smem constant byte address 0x4 - core index']
  #allocation1 [shape = 'u32[144,128]{1,0:T(1,128)}', space=vmem, size = 0x12000, scoped, tag = 'internal scratch']
  %s0 = inlined_call_operand.vmem [shape: f32[8,4], index: 0, kind: input, shape index: {}]
  %s1 = inlined_call_operand.vmem [shape: f32[4,32], index: 1, kind: input, shape index: {}]
  %s2 = inlined_call_operand.vmem [shape: f32[1,32], index: 2, kind: input, shape index: {}]
  %s3 = inlined_call_operand.hbm [shape: f32[32,32], index: 3, kind: input, shape index: {}]
  %s4 = inlined_call_operand.vmem [shape: f32[1,32], index: 4, kind: input, shape index: {}]
  %s5 = inlined_call_operand.hbm [shape: f32[32,128], index: 5, kind: input, shape index: {}]
  %s6 = inlined_call_operand.vmem [shape: f32[1,128], index: 6, kind: input, shape index: {}]
  %s7 = inlined_call_operand.hbm [shape: f32[8,128], index: 7, kind: output, shape index: {}]
  %s8 = sld [smem:[#allocation0]]
  $region46: #{tpu_custom_call.1} parent=0
    _
  %s10 = ssub.s32 1, %s8
  %s11 = scalar_select 0, %s10, %s8
  $region1: #{tpu_custom_call.1} parent=0
    #allocation2 [shape = 'u8[16384]{0}', space=vmem, size = 0x4000, scoped, tag = 'input window, operand 3, single buffered']
    #allocation3 [shape = 's32[1]{0}', space=sflag, size = 0x4, scoped, tag = 'scoped memory for tpu_custom_call.1']
    #allocation4 [shape = 's32[1]{0}', space=sflag, size = 0x4, scoped, tag = 'scoped memory for tpu_custom_call.1']
    #allocation5 [shape = 'u8[16384]{0}', space=vmem, size = 0x4000, scoped, tag = 'input window, operand 5, single buffered']
    #allocation6 [shape = 's32[1]{0}', space=sflag, size = 0x4, scoped, tag = 'scoped memory for tpu_custom_call.1']
    #allocation7 [shape = 'u8[4096]{0}', space=vmem, size = 0x1000, scoped, tag = 'output window, operand 0, single buffered']
    %12 = vsyncpa [#allocation3], 0
    %13 = vsyncpa [#allocation6], 0
    %14 = vsyncpa [#allocation4], 0
    // Predicated region
    $region2: #{tpu_custom_call.1} parent=1 // pred_check
      _
    $region3: #{tpu_custom_call.1} parent=1 // pred_check_branch
      %16 = sbr.rel (0) target = $region5
    $region4: #{tpu_custom_call.1} parent=1 // pred_region
      _
    $region5: #{tpu_custom_call.1} parent=1 // pred_fallthru
      _
    // Predicated region
    $region6: #{tpu_custom_call.1} parent=1 // pred_check
      _
    $region7: #{tpu_custom_call.1} parent=1 // pred_check_branch
      %18 = sbr.rel (0) target = $region9
    $region8: #{tpu_custom_call.1} parent=1 // pred_region
      _
    $region9: #{tpu_custom_call.1} parent=1 // pred_fallthru
      _
    // Predicated region
    $region10: #{tpu_custom_call.1} parent=1 // pred_check
      _
    $region11: #{tpu_custom_call.1} parent=1 // pred_check_branch
      %20 = sbr.rel (0) target = $region13
    $region12: #{tpu_custom_call.1} parent=1 // pred_region
      _
    $region13: #{tpu_custom_call.1} parent=1 // pred_fallthru
      _
    // Predicated region
    $region14: #{tpu_custom_call.1} parent=1 // pred_check
      _
    $region15: #{tpu_custom_call.1} parent=1 // pred_check_branch
      %22 = sbr.rel (0) target = $region17
    $region16: #{tpu_custom_call.1} parent=1 // pred_region
      %s24 = ssub.s32 512, 512
      %25 = vsyncadd [#allocation3], %s24
      %s26 = sshll.u32 [#allocation2], 4
      %s27 = int_to_ptr.vmem [resolvable:$true] %s26
      %32 = dma.hbm_to_vmem [thread:$0]  %s3, 512, %s27, [#allocation3], 128, 128, 8
    $region17: #{tpu_custom_call.1} parent=1 // pred_fallthru
      _
    // Predicated region
    $region18: #{tpu_custom_call.1} parent=1 // pred_check
      _
    $region19: #{tpu_custom_call.1} parent=1 // pred_check_branch
      %34 = sbr.rel (0) target = $region21
    $region20: #{tpu_custom_call.1} parent=1 // pred_region
      _
    $region21: #{tpu_custom_call.1} parent=1 // pred_fallthru
      _
    // Predicated region
    $region22: #{tpu_custom_call.1} parent=1 // pred_check
      _
    $region23: #{tpu_custom_call.1} parent=1 // pred_check_branch
      %36 = sbr.rel (0) target = $region25
    $region24: #{tpu_custom_call.1} parent=1 // pred_region
      %s38 = ssub.s32 512, 512
      %39 = vsyncadd [#allocation6], %s38
      %s40 = sshll.u32 [#allocation5], 4
      %s41 = int_to_ptr.vmem [resolvable:$true] %s40
      %46 = dma.hbm_to_vmem [thread:$0]  %s5, 512, %s41, [#allocation6], 128, 128, 8
    $region25: #{tpu_custom_call.1} parent=1 // pred_fallthru
      _
    // Predicated region
    $region26: #{tpu_custom_call.1} parent=1 // pred_check
      _
    $region27: #{tpu_custom_call.1} parent=1 // pred_check_branch
      %48 = sbr.rel (0) target = $region29
    $region28: #{tpu_custom_call.1} parent=1 // pred_region
      _
    $region29: #{tpu_custom_call.1} parent=1 // pred_fallthru
      _
    // Predicated region
    $region30: #{tpu_custom_call.1} parent=1 // pred_check
      _
    $region31: #{tpu_custom_call.1} parent=1 // pred_check_branch
      %50 = sbr.rel (0) target = $region33
    $region32: #{tpu_custom_call.1} parent=1 // pred_region
      %51 = dma.done [#allocation3], 512
    $region33: #{tpu_custom_call.1} parent=1 // pred_fallthru
      _
    // Predicated region
    $region34: #{tpu_custom_call.1} parent=1 // pred_check
      _
    $region35: #{tpu_custom_call.1} parent=1 // pred_check_branch
      %53 = sbr.rel (0) target = $region37
    $region36: #{tpu_custom_call.1} parent=1 // pred_region
      %54 = dma.done [#allocation6], 512
    $region37: #{tpu_custom_call.1} parent=1 // pred_fallthru
      _
    %v55 = vld [vmem:[%s0] sm:$0xff]
    %v56 = vld [vmem:[%s1] sm:$0xf]
    %v57 = vld [vmem:[%s2] sm:$0x1]
    %v59 = vlaneseq
    %v60 = vshrl.u32 %v59, 7
    %v61 = vsub.s32 0, %v60
    %v62 = vrot.slane %v57, %v61
    %vm64 = vcmask 31744
    %v66 = vsel %vm64, %v55, 0
    %vm68 = vcmask 1043456
    %v70 = vsel %vm68, %v56, 0
    %72 = vmatprep.subr.mxu0 0.0
    %73 = vmatpush1.msra.mxu0 %v70
    %74 = vmatprep.subr.mxu0 0.0
    %75 = vmatpush1.msra.mxu0 0.0
    %76 = vmatprep.subr.mxu0 0.0
    %77 = vmatpush1.msra.mxu0 0.0
    %78 = vmatprep.subr.mxu0 0.0
    %79 = vmatpush1.msra.mxu0 0.0
    %80 = vmatprep.subr.mxu0 0.0
    %81 = vmatpush1.msra.mxu0 0.0
    %82 = vmatprep.subr.mxu0 0.0
    %83 = vmatpush1.msra.mxu0 0.0
    %84 = vmatprep.subr.mxu0 0.0
    %85 = vmatpush1.msra.mxu0 0.0
    %86 = vmatprep.subr.mxu0 0.0
    %87 = vmatpush1.msra.mxu0 0.0
    %88 = vmatprep.subr.mxu0 0.0
    %89 = vmatpush1.msra.mxu0 0.0
    %90 = vmatprep.subr.mxu0 0.0
    %91 = vmatpush1.msra.mxu0 0.0
    %92 = vmatprep.subr.mxu0 0.0
    %93 = vmatpush1.msra.mxu0 0.0
    %94 = vmatprep.subr.mxu0 0.0
    %95 = vmatpush1.msra.mxu0 0.0
    %96 = vmatprep.subr.mxu0 0.0
    %97 = vmatpush1.msra.mxu0 0.0
    %98 = vmatprep.subr.mxu0 0.0
    %99 = vmatpush1.msra.mxu0 0.0
    %100 = vmatprep.subr.mxu0 0.0
    %101 = vmatpush1.msra.mxu0 0.0
    %102 = vmatprep.subr.mxu0 0.0
    %103 = vmatpush1.msra.mxu0 0.0
    %104 = vmatprep.subr.mxu0 0.0
    %105 = vmatpush1.msra.mxu0 0.0
    %106 = vmatprep.subr.mxu0 0.0
    %107 = vmatpush1.msra.mxu0 0.0
    %108 = vmatprep.subr.mxu0 0.0
    %109 = vmatpush1.msra.mxu0 0.0
    %110 = vmatprep.subr.mxu0 0.0
    %111 = vmatpush1.msra.mxu0 0.0
    %112 = vmatprep.subr.mxu0 0.0
    %113 = vmatpush1.msra.mxu0 0.0
    %114 = vmatprep.subr.mxu0 0.0
    %115 = vmatpush1.msra.mxu0 0.0
    %116 = vmatprep.subr.mxu0 0.0
    %117 = vmatpush1.msra.mxu0 0.0
    %118 = vmatprep.subr.mxu0 0.0
    %119 = vmatpush1.msra.mxu0 0.0
    %120 = vmatprep.subr.mxu0 0.0
    %121 = vmatpush1.msra.mxu0 0.0
    %122 = vmatprep.subr.mxu0 0.0
    %123 = vmatpush1.msra.mxu0 0.0
    %124 = vmatprep.subr.mxu0 0.0
    %125 = vmatpush1.msra.mxu0 0.0
    %126 = vmatprep.subr.mxu0 0.0
    %127 = vmatpush1.msra.mxu0 0.0
    %128 = vmatprep.subr.mxu0 0.0
    %129 = vmatpush1.msra.mxu0 0.0
    %130 = vmatprep.subr.mxu0 0.0
    %131 = vmatpush1.msra.mxu0 0.0
    %132 = vmatprep.subr.mxu0 0.0
    %133 = vmatpush1.msra.mxu0 0.0
    %134 = vmatprep.subr.mxu0 0.0
    %135 = vmatpush1.msra.mxu0 0.0
    %136 = vmatprep.mubr.f32.mxu0 0.0
    %137 = vmatmul.mubr.f32.gmra.mrb[0].mxu0 %v66
    %v138 = vpop.f32.mrb[0].mxu0
    %v139 = vadd.f32 %v62, %v138
    %v140 = vpop.f32.mrb[0].mxu0
    %141 = vdwg.mxu0
    %v142 = vmax.f32 %v139, 0.0
    %v143 = vld [vmem:[#allocation2] sm:$0xff]
    %v144 = vld [vmem:[#allocation2 + $0x8] sm:$0xff]
    %v145 = vld [vmem:[#allocation2 + $0x10] sm:$0xff]
    %v146 = vld [vmem:[#allocation2 + $0x18] sm:$0xff]
    %v147 = vld [vmem:[%s4] sm:$0x1]
    %v149 = vlaneseq
    %v150 = vshrl.u32 %v149, 7
    %v151 = vsub.s32 0, %v150
    %v152 = vrot.slane %v147, %v151
    %vm154 = vcmask 261120
    %v156 = vsel %vm154, %v142, 0
    %158 = vmatprep.subr.mxu0 0.0
    %159 = vmatpush1.msra.mxu0 %v143
    %160 = vmatprep.subr.mxu0 0.0
    %161 = vmatpush1.msra.mxu0 %v144
    %162 = vmatprep.subr.mxu0 0.0
    %163 = vmatpush1.msra.mxu0 %v145
    %164 = vmatprep.subr.mxu0 0.0
    %165 = vmatpush1.msra.mxu0 %v146
    %166 = vmatprep.subr.mxu0 0.0
    %167 = vmatpush1.msra.mxu0 0.0
    %168 = vmatprep.subr.mxu0 0.0
    %169 = vmatpush1.msra.mxu0 0.0
    %170 = vmatprep.subr.mxu0 0.0
    %171 = vmatpush1.msra.mxu0 0.0
    %172 = vmatprep.subr.mxu0 0.0
    %173 = vmatpush1.msra.mxu0 0.0
    %174 = vmatprep.subr.mxu0 0.0
    %175 = vmatpush1.msra.mxu0 0.0
    %176 = vmatprep.subr.mxu0 0.0
    %177 = vmatpush1.msra.mxu0 0.0
    %178 = vmatprep.subr.mxu0 0.0
    %179 = vmatpush1.msra.mxu0 0.0
    %180 = vmatprep.subr.mxu0 0.0
    %181 = vmatpush1.msra.mxu0 0.0
    %182 = vmatprep.subr.mxu0 0.0
    %183 = vmatpush1.msra.mxu0 0.0
    %184 = vmatprep.subr.mxu0 0.0
    %185 = vmatpush1.msra.mxu0 0.0
    %186 = vmatprep.subr.mxu0 0.0
    %187 = vmatpush1.msra.mxu0 0.0
    %188 = vmatprep.subr.mxu0 0.0
    %189 = vmatpush1.msra.mxu0 0.0
    %190 = vmatprep.subr.mxu0 0.0
    %191 = vmatpush1.msra.mxu0 0.0
    %192 = vmatprep.subr.mxu0 0.0
    %193 = vmatpush1.msra.mxu0 0.0
    %194 = vmatprep.subr.mxu0 0.0
    %195 = vmatpush1.msra.mxu0 0.0
    %196 = vmatprep.subr.mxu0 0.0
    %197 = vmatpush1.msra.mxu0 0.0
    %198 = vmatprep.subr.mxu0 0.0
    %199 = vmatpush1.msra.mxu0 0.0
    %200 = vmatprep.subr.mxu0 0.0
    %201 = vmatpush1.msra.mxu0 0.0
    %202 = vmatprep.subr.mxu0 0.0
    %203 = vmatpush1.msra.mxu0 0.0
    %204 = vmatprep.subr.mxu0 0.0
    %205 = vmatpush1.msra.mxu0 0.0
    %206 = vmatprep.subr.mxu0 0.0
    %207 = vmatpush1.msra.mxu0 0.0
    %208 = vmatprep.subr.mxu0 0.0
    %209 = vmatpush1.msra.mxu0 0.0
    %210 = vmatprep.subr.mxu0 0.0
    %211 = vmatpush1.msra.mxu0 0.0
    %212 = vmatprep.subr.mxu0 0.0
    %213 = vmatpush1.msra.mxu0 0.0
    %214 = vmatprep.subr.mxu0 0.0
    %215 = vmatpush1.msra.mxu0 0.0
    %216 = vmatprep.subr.mxu0 0.0
    %217 = vmatpush1.msra.mxu0 0.0
    %218 = vmatprep.subr.mxu0 0.0
    %219 = vmatpush1.msra.mxu0 0.0
    %220 = vmatprep.subr.mxu0 0.0
    %221 = vmatpush1.msra.mxu0 0.0
    %222 = vmatprep.mubr.f32.mxu0 0.0
    %223 = vmatmul.mubr.f32.gmra.mrb[0].mxu0 %v156
    %v224 = vpop.f32.mrb[0].mxu0
    %v225 = vadd.f32 %v152, %v224
    %v226 = vpop.f32.mrb[0].mxu0
    %227 = vdwg.mxu0
    %v228 = vmax.f32 %v225, 0.0
    %v229 = vld [vmem:[#allocation5] sm:$0xff]
    %v230 = vld [vmem:[#allocation5 + $0x8] sm:$0xff]
    %v231 = vld [vmem:[#allocation5 + $0x10] sm:$0xff]
    %v232 = vld [vmem:[#allocation5 + $0x18] sm:$0xff]
    %v233 = vld [vmem:[%s6] sm:$0x1]
    %v235 = vlaneseq
    %v236 = vshrl.u32 %v235, 7
    %v237 = vsub.s32 0, %v236
    %v238 = vrot.slane %v233, %v237
    %v241 = vsel %vm154, %v228, 0
    %243 = vmatprep.subr.mxu0 0.0
    %244 = vmatpush1.msra.mxu0 %v229
    %245 = vmatprep.subr.mxu0 0.0
    %246 = vmatpush1.msra.mxu0 %v230
    %247 = vmatprep.subr.mxu0 0.0
    %248 = vmatpush1.msra.mxu0 %v231
    %249 = vmatprep.subr.mxu0 0.0
    %250 = vmatpush1.msra.mxu0 %v232
    %251 = vmatprep.subr.mxu0 0.0
    %252 = vmatpush1.msra.mxu0 0.0
    %253 = vmatprep.subr.mxu0 0.0
    %254 = vmatpush1.msra.mxu0 0.0
    %255 = vmatprep.subr.mxu0 0.0
    %256 = vmatpush1.msra.mxu0 0.0
    %257 = vmatprep.subr.mxu0 0.0
    %258 = vmatpush1.msra.mxu0 0.0
    %259 = vmatprep.subr.mxu0 0.0
    %260 = vmatpush1.msra.mxu0 0.0
    %261 = vmatprep.subr.mxu0 0.0
    %262 = vmatpush1.msra.mxu0 0.0
    %263 = vmatprep.subr.mxu0 0.0
    %264 = vmatpush1.msra.mxu0 0.0
    %265 = vmatprep.subr.mxu0 0.0
    %266 = vmatpush1.msra.mxu0 0.0
    %267 = vmatprep.subr.mxu0 0.0
    %268 = vmatpush1.msra.mxu0 0.0
    %269 = vmatprep.subr.mxu0 0.0
    %270 = vmatpush1.msra.mxu0 0.0
    %271 = vmatprep.subr.mxu0 0.0
    %272 = vmatpush1.msra.mxu0 0.0
    %273 = vmatprep.subr.mxu0 0.0
    %274 = vmatpush1.msra.mxu0 0.0
    %275 = vmatprep.subr.mxu0 0.0
    %276 = vmatpush1.msra.mxu0 0.0
    %277 = vmatprep.subr.mxu0 0.0
    %278 = vmatpush1.msra.mxu0 0.0
    %279 = vmatprep.subr.mxu0 0.0
    %280 = vmatpush1.msra.mxu0 0.0
    %281 = vmatprep.subr.mxu0 0.0
    %282 = vmatpush1.msra.mxu0 0.0
    %283 = vmatprep.subr.mxu0 0.0
    %284 = vmatpush1.msra.mxu0 0.0
    %285 = vmatprep.subr.mxu0 0.0
    %286 = vmatpush1.msra.mxu0 0.0
    %287 = vmatprep.subr.mxu0 0.0
    %288 = vmatpush1.msra.mxu0 0.0
    %289 = vmatprep.subr.mxu0 0.0
    %290 = vmatpush1.msra.mxu0 0.0
    %291 = vmatprep.subr.mxu0 0.0
    %292 = vmatpush1.msra.mxu0 0.0
    %293 = vmatprep.subr.mxu0 0.0
    %294 = vmatpush1.msra.mxu0 0.0
    %295 = vmatprep.subr.mxu0 0.0
    %296 = vmatpush1.msra.mxu0 0.0
    %297 = vmatprep.subr.mxu0 0.0
    %298 = vmatpush1.msra.mxu0 0.0
    %299 = vmatprep.subr.mxu0 0.0
    %300 = vmatpush1.msra.mxu0 0.0
    %301 = vmatprep.subr.mxu0 0.0
    %302 = vmatpush1.msra.mxu0 0.0
    %303 = vmatprep.subr.mxu0 0.0
    %304 = vmatpush1.msra.mxu0 0.0
    %305 = vmatprep.subr.mxu0 0.0
    %306 = vmatpush1.msra.mxu0 0.0
    %307 = vmatprep.mubr.f32.mxu0 0.0
    %308 = vmatmul.mubr.f32.gmra.mrb[0].mxu0 %v241
    %v309 = vpop.f32.mrb[0].mxu0
    %v310 = vadd.f32 %v238, %v309
    %v311 = vpop.f32.mrb[0].mxu0
    %312 = vdwg.mxu0
    %313 = vmax.xlane.f32.xlu0 %v310
    %v314 = vpop.xlane.xlu0 %313
    %v315 = vsub.f32 %v310, %v314
    %v316 = vmul.f32 %v315, 1.442695
    %v317 = vpow.pop %v316
    %318 = vadd.xlane.f32.xlu0 %v317
    %v319 = vpop.xlane.xlu0 %318
    %v320 = vrcp.pop %v319
    %v321 = vmul.f32 %v317, %v320
    %322 = vst [vmem:[#allocation7] sm:$0xff] %v321
    // Predicated region
    $region38: #{tpu_custom_call.1} parent=1 // pred_check
      _
    $region39: #{tpu_custom_call.1} parent=1 // pred_check_branch
      %324 = sbr.rel (0) target = $region41
    $region40: #{tpu_custom_call.1} parent=1 // pred_region
      %s326 = ssub.s32 128, 128
      %327 = vsyncadd [#allocation4], %s326
      %s329 = sshll.u32 [#allocation7], 4
      %s330 = int_to_ptr.vmem [resolvable:$true] %s329
      %332 = dma.vmem_to_hbm [thread:$0]  %s330, 128, %s7, [#allocation4]
    $region41: #{tpu_custom_call.1} parent=1 // pred_fallthru
      _
    // Predicated region
    $region42: #{tpu_custom_call.1} parent=1 // pred_check
      _
    $region43: #{tpu_custom_call.1} parent=1 // pred_check_branch
      %334 = sbr.rel (0) target = $region45
    $region44: #{tpu_custom_call.1} parent=1 // pred_region
      %335 = dma.done [#allocation4], 128
    $region45: #{tpu_custom_call.1} parent=1 // pred_fallthru
      _
    %336 = vsyncpa [#allocation3], 1
    %337 = vsyncpa [#allocation6], 1
    %338 = vsyncpa [#allocation4], 1

</llo_original>
